<compile_context>
chip_gen: v6e
topology: v6e:2x2x1
jax: 0.10.0
libtpu: 0.0.40
codegen_flags: <defaults>
</compile_context>

<pallas_src>
import jax
import jax.numpy as jnp
from jax.experimental import pallas as pl
from jax.experimental.pallas import tpu as pltpu


def attention_kernel(x_ref, w_ref, ctx_ref, attn_ref):
    # x_ref:    (BB, T, H)  block of batch elements
    # w_ref:    (1, H)      linear weight (same layout as torch nn.Linear(H,1).weight)
    # ctx_ref:  (BB, H)     attention-pooled context (lane-dense)
    # attn_ref: (BB, T)     attention weights (lane-dense)
    x = x_ref[...]                          # (BB, T, H), native dtype
    w = w_ref[...].astype(x.dtype)          # (1, H)

    # scores[b, t] = sum_h x[b, t, h] * w[h]   (VPU mul + XLU lane reduce, f32 acc)
    # (bias omitted: softmax is shift-invariant, so it cancels from both outputs)
    s = jnp.sum(x * w[None], axis=-1, dtype=jnp.float32)      # (BB, T) f32

    # numerically-stable softmax over the sequence axis (f32)
    m = jnp.max(s, axis=-1, keepdims=True)                     # (BB, 1)
    e = jnp.exp(s - m)                                         # (BB, T)
    p = e / jnp.sum(e, axis=-1, keepdims=True)                 # (BB, T) f32

    # context: batched (1, T) @ (T, H) on the MXU, f32 accumulation
    p3 = p.astype(x.dtype)[:, None, :]                         # (BB, 1, T)
    ctx = jnp.einsum(
        "bqt,bth->bqh", p3, x, preferred_element_type=jnp.float32
    )[:, 0, :]                                                 # (BB, H) f32

    attn_ref[...] = p.astype(attn_ref.dtype)
    ctx_ref[...] = ctx.astype(ctx_ref.dtype)


def _choose_block_b(B, T, H, itemsize, budget_bytes=20 << 20):
    """Batch rows per grid step.

    The double-buffered input block plus outputs must fit a scoped-VMEM budget
    that is safe on every generation (v7x: 64 MiB physical / 32 MiB default
    scoped; v6e: 128/32; v5e: 128/16 -> we raise vmem_limit_bytes to 32 MiB).
    Candidates are multiples of 8 (sublane-aligned output blocks) dividing B;
    for tiny B the whole batch goes in one step (block == full dims is always
    layout-legal).  When possible we keep >= 2 grid steps so the "parallel"
    batch axis can shard across TensorCores (v7x has 2 TCs per chip).
    """
    bytes_per_row = 2 * (T * H + H + T) * itemsize  # 2x = double buffering
    max_rows = max(1, budget_bytes // max(1, bytes_per_row))
    cands = [bb for bb in range(8, min(B, max_rows) + 1, 8) if B % bb == 0]
    if not cands:
        return B
    multi_step = [bb for bb in cands if B // bb >= 2]
    return max(multi_step) if multi_step else max(cands)


def attention_pallas(lstm_out, weight, bias=None, *, block_b=None):
    """lstm_out: (B, T, H); weight: (1, H) (torch Linear(H,1) layout); bias ignored.

    Returns (context (B, H), attn_weights (B, T)) matching the PyTorch module.
    The bias is mathematically irrelevant (softmax shift-invariance) and is not
    DMA'd into the kernel.
    """
    B, T, H = lstm_out.shape
    dtype = lstm_out.dtype
    if block_b is None:
        block_b = _choose_block_b(B, T, H, jnp.dtype(dtype).itemsize)
    assert B % block_b == 0, "block_b must divide the batch size"
    grid = (B // block_b,)

    ctx, attn = pl.pallas_call(
        attention_kernel,
        out_shape=(
            jax.ShapeDtypeStruct((B, H), dtype),
            jax.ShapeDtypeStruct((B, T), dtype),
        ),
        grid=grid,
        in_specs=[
            pl.BlockSpec((block_b, T, H), lambda b: (b, 0, 0)),
            pl.BlockSpec((1, H), lambda b: (0, 0)),
        ],
        out_specs=(
            pl.BlockSpec((block_b, H), lambda b: (b, 0)),
            pl.BlockSpec((block_b, T), lambda b: (b, 0)),
        ),
        compiler_params=pltpu.CompilerParams(
            dimension_semantics=("parallel",),
            vmem_limit_bytes=32 * 1024 * 1024,
        ),
    )(lstm_out, weight)
    return ctx, attn


def attention_ref(lstm_out, weight, bias):
    # pure-JAX reference reproducing the PyTorch forward (bias included)
    scores = jnp.einsum("bth,oh->bto", lstm_out, weight)[..., 0] + bias[0]  # (B, T)
    attn = jax.nn.softmax(scores, axis=1)                                    # (B, T)
    ctx = jnp.sum(attn[..., None] * lstm_out, axis=1)                        # (B, H)
    return ctx, attn


if __name__ == "__main__":
    B, T, H = 2, 8, 32  # batch, seq_len, hidden_size

    key = jax.random.PRNGKey(0)
    kx, kw, kb = jax.random.split(key, 3)

    lstm_out = jax.random.normal(kx, (B, T, H), dtype=jnp.float32)
    # nn.Linear(H, 1): weight (1, H), bias (1); init ~ U(-1/sqrt(H), 1/sqrt(H)).
    bound = 1.0 / (H ** 0.5)
    weight = jax.random.uniform(kw, (1, H), jnp.float32, -bound, bound)
    bias = jax.random.uniform(kb, (1,), jnp.float32, -bound, bound)

    ctx, attn = attention_pallas(lstm_out, weight, bias)
    ctx = jax.block_until_ready(ctx)
    attn = jax.block_until_ready(attn)

    ctx_r, attn_r = attention_ref(lstm_out, weight, bias)
    assert ctx.shape == (B, H) and attn.shape == (B, T)
    assert jnp.allclose(ctx, ctx_r, atol=1e-5, rtol=1e-5)
    assert jnp.allclose(attn, attn_r, atol=1e-5, rtol=1e-5)

    print("KERNEL_OK")
</pallas_src>

<mosaic_0001>
module attributes {stable_mosaic.version = 11 : i64} {
  func.func @attention_kernel(%arg0: i32, %arg1: memref<2x8x32xf32, #tpu.memory_space<vmem>>, %arg2: memref<1x32xf32, #tpu.memory_space<vmem>>, %arg3: memref<2x32xf32, #tpu.memory_space<vmem>>, %arg4: memref<2x8xf32, #tpu.memory_space<vmem>>) attributes {dimension_semantics = [#tpu.dimension_semantics<parallel>], iteration_bounds = array<i64: 1>, scalar_prefetch = 0 : i64, scratch_operands = 0 : i64, tpu.core_type = #tpu.core_type<tc>, window_params = [{transform_indices = @transform_0, window_bounds = array<i64: 2, 8, 32>}, {pipeline_mode = #tpu.pipeline_mode<synchronous>, transform_indices = @transform_1, window_bounds = array<i64: 1, 32>}, {transform_indices = @transform_2, window_bounds = array<i64: 2, 32>}, {transform_indices = @transform_3, window_bounds = array<i64: 2, 8>}]} {
    %c0 = arith.constant 0 : index
    %c0_0 = arith.constant 0 : index
    %c0_1 = arith.constant 0 : index
    %0 = vector.load %arg1[%c0, %c0_0, %c0_1] : memref<2x8x32xf32, #tpu.memory_space<vmem>>, vector<2x8x32xf32>
    %c0_2 = arith.constant 0 : index
    %c0_3 = arith.constant 0 : index
    %1 = vector.load %arg2[%c0_2, %c0_3] : memref<1x32xf32, #tpu.memory_space<vmem>>, vector<1x32xf32>
    %2 = vector.shape_cast %1 : vector<1x32xf32> to vector<1x1x32xf32>
    %3 = vector.broadcast %2 : vector<1x1x32xf32> to vector<2x8x32xf32>
    %4 = arith.mulf %0, %3 : vector<2x8x32xf32>
    %cst = arith.constant dense<0.000000e+00> : vector<2x8xf32>
    %5 = vector.multi_reduction <add>, %4, %cst [2] : vector<2x8x32xf32> to vector<2x8xf32>
    %cst_4 = arith.constant dense<0xFF800000> : vector<2xf32>
    %6 = vector.multi_reduction <maximumf>, %5, %cst_4 [1] : vector<2x8xf32> to vector<2xf32>
    %7 = vector.shape_cast %6 : vector<2xf32> to vector<2x1xf32>
    %8 = vector.broadcast %7 : vector<2x1xf32> to vector<2x8xf32>
    %9 = arith.subf %5, %8 : vector<2x8xf32>
    %10 = math.exp %9 : vector<2x8xf32>
    %cst_5 = arith.constant dense<0.000000e+00> : vector<2xf32>
    %11 = vector.multi_reduction <add>, %10, %cst_5 [1] : vector<2x8xf32> to vector<2xf32>
    %12 = vector.shape_cast %11 : vector<2xf32> to vector<2x1xf32>
    %13 = vector.broadcast %12 : vector<2x1xf32> to vector<2x8xf32>
    %14 = arith.divf %10, %13 : vector<2x8xf32>
    %15 = vector.shape_cast %14 : vector<2x8xf32> to vector<2x1x8xf32>
    "tpu.trace_start"() <{level = 10 : i32, message = "bqt,bth->bqh"}> : () -> ()
    %cst_6 = arith.constant dense<0.000000e+00> : vector<2x1x32xf32>
    %16 = tpu.matmul %15, %0, %cst_6 {dimension_numbers = #tpu.dot_dimension_numbers<[2], [1], [1], [2], [0, 0, 0, 1, 1, 2], [0], [0]>} : vector<2x1x8xf32>, vector<2x8x32xf32>, vector<2x1x32xf32> -> vector<2x1x32xf32>
    "tpu.trace_stop"() : () -> ()
    %17 = vector.shape_cast %16 : vector<2x1x32xf32> to vector<2x32xf32>
    %c0_7 = arith.constant 0 : index
    %c0_8 = arith.constant 0 : index
    %18 = vector.load %arg4[%c0_7, %c0_8] : memref<2x8xf32, #tpu.memory_space<vmem>>, vector<2x8xf32>
    tpu.vector_store %arg4[%c0_7, %c0_8], %14 {strides = array<i32>} : memref<2x8xf32, #tpu.memory_space<vmem>>, vector<2x8xf32>,
    %c0_9 = arith.constant 0 : index
    %c0_10 = arith.constant 0 : index
    %19 = vector.load %arg3[%c0_9, %c0_10] : memref<2x32xf32, #tpu.memory_space<vmem>>, vector<2x32xf32>
    tpu.vector_store %arg3[%c0_9, %c0_10], %17 {strides = array<i32>} : memref<2x32xf32, #tpu.memory_space<vmem>>, vector<2x32xf32>,
    return
  }
  func.func @transform_0(%arg0: i32) -> (i32, i32, i32) {
    %c0_i32 = arith.constant 0 : i32
    %c0_i32_0 = arith.constant 0 : i32
    %c0_i32_1 = arith.constant 0 : i32
    return %arg0, %c0_i32, %c0_i32_0 : i32, i32, i32
  }
  func.func @transform_1(%arg0: i32) -> (i32, i32) {
    %c0_i32 = arith.constant 0 : i32
    %c0_i32_0 = arith.constant 0 : i32
    %c0_i32_1 = arith.constant 0 : i32
    return %c0_i32, %c0_i32_0 : i32, i32
  }
  func.func @transform_2(%arg0: i32) -> (i32, i32) {
    %c0_i32 = arith.constant 0 : i32
    %c0_i32_0 = arith.constant 0 : i32
    return %arg0, %c0_i32 : i32, i32
  }
  func.func @transform_3(%arg0: i32) -> (i32, i32) {
    %c0_i32 = arith.constant 0 : i32
    %c0_i32_0 = arith.constant 0 : i32
    return %arg0, %c0_i32 : i32, i32
  }
}

</mosaic_0001>

<llo_original>
// kernel: tpu_custom_call.1
$region0: #{tpu_custom_call.1}
  #allocation0 [shape = 'u32[]', space=smem, size = 0x4, offset = 0x4, fixed_abs, tag = 'smem constant byte address 0x4 - core index']
  #allocation1 [shape = 'u32[144,128]{1,0:T(1,128)}', space=vmem, size = 0x12000, scoped, tag = 'internal scratch']
  %s0 = inlined_call_operand.hbm [shape: f32[2,8,32], index: 0, kind: input, shape index: {}]
  %s1 = inlined_call_operand.vmem [shape: f32[1,32], index: 1, kind: input, shape index: {}]
  %s2 = inlined_call_operand.hbm [shape: f32[2,32], index: 2, kind: output, shape index: {0}]
  %s3 = inlined_call_operand.hbm [shape: f32[2,8], index: 3, kind: output, shape index: {1}]
  %4 = xla_tuple %s2, %s3
  %s5 = sld [smem:[#allocation0]]
  $region30: #{tpu_custom_call.1} parent=0
    _
  %s7 = ssub.s32 1, %s5
  %s8 = scalar_select 0, %s7, %s5
  $region1: #{tpu_custom_call.1} parent=0
    #allocation2 [shape = 'u8[8192]{0}', space=vmem, size = 0x2000, scoped, tag = 'input window, operand 0, single buffered']
    #allocation3 [shape = 's32[1]{0}', space=sflag, size = 0x4, scoped, tag = 'scoped memory for tpu_custom_call.1']
    #allocation4 [shape = 's32[1]{0}', space=sflag, size = 0x4, scoped, tag = 'scoped memory for tpu_custom_call.1']
    #allocation5 [shape = 'u8[1024]{0}', space=vmem, size = 0x400, scoped, tag = 'output window, operand 0, single buffered']
    #allocation6 [shape = 'u8[1024]{0}', space=vmem, size = 0x400, scoped, tag = 'output window, operand 1, single buffered']
    #allocation7 [shape = 's32[1]{0}', space=sflag, size = 0x4, scoped, tag = 'scoped memory for tpu_custom_call.1']
    %9 = vsyncpa [#allocation3], 0
    %10 = vsyncpa [#allocation4], 0
    %11 = vsyncpa [#allocation7], 0
    // Predicated region
    $region2: #{tpu_custom_call.1} parent=1 // pred_check
      _
    $region3: #{tpu_custom_call.1} parent=1 // pred_check_branch
      %13 = sbr.rel (0) target = $region5
    $region4: #{tpu_custom_call.1} parent=1 // pred_region
      %s15 = ssub.s32 256, 256
      %16 = vsyncadd [#allocation3], %s15
      %s17 = sshll.u32 [#allocation2], 4
      %s18 = int_to_ptr.vmem [resolvable:$true] %s17
      %23 = dma.hbm_to_vmem [thread:$0]  %s0, 256, %s18, [#allocation3], 128, 128, 8
    $region5: #{tpu_custom_call.1} parent=1 // pred_fallthru
      _
    // Predicated region
    $region6: #{tpu_custom_call.1} parent=1 // pred_check
      _
    $region7: #{tpu_custom_call.1} parent=1 // pred_check_branch
      %25 = sbr.rel (0) target = $region9
    $region8: #{tpu_custom_call.1} parent=1 // pred_region
      _
    $region9: #{tpu_custom_call.1} parent=1 // pred_fallthru
      _
    // Predicated region
    $region10: #{tpu_custom_call.1} parent=1 // pred_check
      _
    $region11: #{tpu_custom_call.1} parent=1 // pred_check_branch
      %27 = sbr.rel (0) target = $region13
    $region12: #{tpu_custom_call.1} parent=1 // pred_region
      %28 = dma.done [#allocation3], 256
    $region13: #{tpu_custom_call.1} parent=1 // pred_fallthru
      _
    %v29 = vld [vmem:[#allocation2] sm:$0xff]
    %v30 = vld [vmem:[#allocation2 + $0x8] sm:$0xff]
    %v31 = vld [vmem:[%s1] sm:$0x1]
    %v33 = vlaneseq
    %v34 = vshrl.u32 %v33, 7
    %v35 = vsub.s32 0, %v34
    %v36 = vrot.slane %v31, %v35
    %v38 = vmul.f32 %v29, %v36
    %v39 = vmul.f32 %v30, %v36
    %vm40 = vcmask 261120
    %v41 = vsel %vm40, %v38, 0.0
    %42 = vadd.xlane.f32.xlu0 %v41
    %v43 = vpop.xlane.xlu0 %42
    %v44 = vsel %vm40, %v39, 0.0
    %45 = vadd.xlane.f32.xlu0 %v44
    %v46 = vpop.xlane.xlu0 %45
    %v49 = vlaneseq
    %v50 = vand.u32 %v49, 127
    %v51 = vlaneseq
    %v52 = vshrl.u32 %v51, 7
    %v53 = vsub.s32 %v50, %v52
    %v54 = vrot.slane %v43, %v53
    %v55 = vlaneseq
    %v56 = vshrl.u32 %v55, 7
    %v57 = vsub.s32 %v50, %v56
    %v58 = vrot.slane %v46, %v57
    %vm59 = vcmask 1041409
    %v60 = vsel %vm59, %v58, %v54
    %vm62 = vcmask 58368
    %v63 = vsel %vm62, %v60, -inf
    %64 = vmax.xlane.f32.xlu0 %v63
    %v65 = vpop.xlane.xlu0 %64
    %v67 = vlaneseq
    %v68 = vshrl.u32 %v67, 7
    %v69 = vsub.s32 0, %v68
    %v70 = vrot.slane %v65, %v69
    %v71 = vlaneseq
    %v72 = vshrl.u32 %v71, 7
    %v73 = vsub.s32 1, %v72
    %v74 = vrot.slane %v65, %v73
    %v77 = vsub.f32 %v43, %v70
    %v78 = vsub.f32 %v46, %v74
    %v79 = vmul.f32 %v77, 1.442695
    %v80 = vpow.pop %v79
    %v81 = vmul.f32 %v78, 1.442695
    %v82 = vpow.pop %v81
    %85 = vset.pattern.permute.xlu0 0
    %86 = vperm.xlu0 %85, %v80
    %v87 = vpop.permute.xlu0 %86
    %88 = vset.pattern.permute.xlu0 0
    %89 = vperm.xlu0 %88, %v82
    %v90 = vpop.permute.xlu0 %89
    %v91 = vlaneseq
    %v92 = vshrl.u32 %v91, 7
    %v93 = vsub.s32 %v50, %v92
    %v94 = vrot.slane %v87, %v93
    %v95 = vlaneseq
    %v96 = vshrl.u32 %v95, 7
    %v97 = vsub.s32 %v50, %v96
    %v98 = vrot.slane %v90, %v97
    %v99 = vsel %vm59, %v98, %v94
    %v101 = vsel %vm62, %v99, 0.0
    %102 = vadd.xlane.f32.xlu0 %v101
    %v103 = vpop.xlane.xlu0 %102
    %v105 = vlaneseq
    %v106 = vshrl.u32 %v105, 7
    %v107 = vsub.s32 0, %v106
    %v108 = vrot.slane %v103, %v107
    %v109 = vlaneseq
    %v110 = vshrl.u32 %v109, 7
    %v111 = vsub.s32 1, %v110
    %v112 = vrot.slane %v103, %v111
    %v115 = vrcp.pop %v108
    %v116 = vmul.f32 %v80, %v115
    %v117 = vrcp.pop %v112
    %v118 = vmul.f32 %v82, %v117
    %120 = vset.pattern.permute.xlu0 0
    %121 = vperm.xlu0 %120, %v116
    %v122 = vpop.permute.xlu0 %121
    %v123 = vlaneseq
    %v124 = vshrl.u32 %v123, 7
    %v125 = vsub.s32 %v50, %v124
    %v126 = vrot.slane %v122, %v125
    %vm127 = vcmask 64512
    %v128 = vsel %vm127, %v126, 0
    %130 = vmatprep.subr.mxu0 0.0
    %131 = vmatpush1.msra.mxu0 0.0
    %132 = vmatprep.subr.mxu0 0.0
    %133 = vmatpush1.msra.mxu0 0.0
    %134 = vmatprep.subr.mxu0 0.0
    %135 = vmatpush1.msra.mxu0 0.0
    %136 = vmatprep.subr.mxu0 0.0
    %137 = vmatpush1.msra.mxu0 0.0
    %138 = vmatprep.subr.mxu0 0.0
    %139 = vmatpush1.msra.mxu0 0.0
    %140 = vmatprep.subr.mxu0 0.0
    %141 = vmatpush1.msra.mxu0 0.0
    %142 = vmatprep.subr.mxu0 0.0
    %143 = vmatpush1.msra.mxu0 0.0
    %144 = vmatprep.subr.mxu0 0.0
    %145 = vmatpush1.msra.mxu0 0.0
    %146 = vmatprep.subr.mxu0 0.0
    %147 = vmatpush1.msra.mxu0 0.0
    %148 = vmatprep.subr.mxu0 0.0
    %149 = vmatpush1.msra.mxu0 0.0
    %150 = vmatprep.subr.mxu0 0.0
    %151 = vmatpush1.msra.mxu0 0.0
    %152 = vmatprep.subr.mxu0 0.0
    %153 = vmatpush1.msra.mxu0 0.0
    %154 = vmatprep.subr.mxu0 0.0
    %155 = vmatpush1.msra.mxu0 0.0
    %156 = vmatprep.subr.mxu0 0.0
    %157 = vmatpush1.msra.mxu0 0.0
    %158 = vmatprep.subr.mxu0 0.0
    %159 = vmatpush1.msra.mxu0 0.0
    %160 = vmatprep.subr.mxu0 0.0
    %161 = vmatpush1.msra.mxu0 %v29
    %162 = vmatprep.subr.mxu0 0.0
    %163 = vmatpush2.msra.mxu0 0.0
    %164 = vmatprep.subr.mxu0 0.0
    %165 = vmatpush2.msra.mxu0 0.0
    %166 = vmatprep.subr.mxu0 0.0
    %167 = vmatpush2.msra.mxu0 0.0
    %168 = vmatprep.subr.mxu0 0.0
    %169 = vmatpush2.msra.mxu0 0.0
    %170 = vmatprep.subr.mxu0 0.0
    %171 = vmatpush2.msra.mxu0 0.0
    %172 = vmatprep.subr.mxu0 0.0
    %173 = vmatpush2.msra.mxu0 0.0
    %174 = vmatprep.subr.mxu0 0.0
    %175 = vmatpush2.msra.mxu0 0.0
    %176 = vmatprep.subr.mxu0 0.0
    %177 = vmatpush2.msra.mxu0 0.0
    %178 = vmatprep.subr.mxu0 0.0
    %179 = vmatpush2.msra.mxu0 0.0
    %180 = vmatprep.subr.mxu0 0.0
    %181 = vmatpush2.msra.mxu0 0.0
    %182 = vmatprep.subr.mxu0 0.0
    %183 = vmatpush2.msra.mxu0 0.0
    %184 = vmatprep.subr.mxu0 0.0
    %185 = vmatpush2.msra.mxu0 0.0
    %186 = vmatprep.subr.mxu0 0.0
    %187 = vmatpush2.msra.mxu0 0.0
    %188 = vmatprep.subr.mxu0 0.0
    %189 = vmatpush2.msra.mxu0 0.0
    %190 = vmatprep.subr.mxu0 0.0
    %191 = vmatpush2.msra.mxu0 0.0
    %192 = vmatprep.subr.mxu0 0.0
    %193 = vmatpush2.msra.mxu0 0.0
    %194 = vmatprep.mubr.f32.mxu0 0.0
    %195 = vmatmul.mubr.f32.gmra.mxu0 %v128
    %v196 = vpop.f32.mrf.mxu0
    %v197 = vadd.f32 0.0, %v196
    %v198 = vpop.f32.mrf.mxu0
    %199 = vdwg.mxu0
    %201 = vset.pattern.permute.xlu0 0
    %202 = vperm.xlu0 %201, %v118
    %v203 = vpop.permute.xlu0 %202
    %v204 = vlaneseq
    %v205 = vshrl.u32 %v204, 7
    %v206 = vsub.s32 %v50, %v205
    %v207 = vrot.slane %v203, %v206
    %v208 = vsel %vm127, %v207, 0
    %210 = vmatprep.subr.mxu0 0.0
    %211 = vmatpush1.msra.mxu0 0.0
    %212 = vmatprep.subr.mxu0 0.0
    %213 = vmatpush1.msra.mxu0 0.0
    %214 = vmatprep.subr.mxu0 0.0
    %215 = vmatpush1.msra.mxu0 0.0
    %216 = vmatprep.subr.mxu0 0.0
    %217 = vmatpush1.msra.mxu0 0.0
    %218 = vmatprep.subr.mxu0 0.0
    %219 = vmatpush1.msra.mxu0 0.0
    %220 = vmatprep.subr.mxu0 0.0
    %221 = vmatpush1.msra.mxu0 0.0
    %222 = vmatprep.subr.mxu0 0.0
    %223 = vmatpush1.msra.mxu0 0.0
    %224 = vmatprep.subr.mxu0 0.0
    %225 = vmatpush1.msra.mxu0 0.0
    %226 = vmatprep.subr.mxu0 0.0
    %227 = vmatpush1.msra.mxu0 0.0
    %228 = vmatprep.subr.mxu0 0.0
    %229 = vmatpush1.msra.mxu0 0.0
    %230 = vmatprep.subr.mxu0 0.0
    %231 = vmatpush1.msra.mxu0 0.0
    %232 = vmatprep.subr.mxu0 0.0
    %233 = vmatpush1.msra.mxu0 0.0
    %234 = vmatprep.subr.mxu0 0.0
    %235 = vmatpush1.msra.mxu0 0.0
    %236 = vmatprep.subr.mxu0 0.0
    %237 = vmatpush1.msra.mxu0 0.0
    %238 = vmatprep.subr.mxu0 0.0
    %239 = vmatpush1.msra.mxu0 0.0
    %240 = vmatprep.subr.mxu0 0.0
    %241 = vmatpush1.msra.mxu0 %v30
    %242 = vmatprep.subr.mxu0 0.0
    %243 = vmatpush2.msra.mxu0 0.0
    %244 = vmatprep.subr.mxu0 0.0
    %245 = vmatpush2.msra.mxu0 0.0
    %246 = vmatprep.subr.mxu0 0.0
    %247 = vmatpush2.msra.mxu0 0.0
    %248 = vmatprep.subr.mxu0 0.0
    %249 = vmatpush2.msra.mxu0 0.0
    %250 = vmatprep.subr.mxu0 0.0
    %251 = vmatpush2.msra.mxu0 0.0
    %252 = vmatprep.subr.mxu0 0.0
    %253 = vmatpush2.msra.mxu0 0.0
    %254 = vmatprep.subr.mxu0 0.0
    %255 = vmatpush2.msra.mxu0 0.0
    %256 = vmatprep.subr.mxu0 0.0
    %257 = vmatpush2.msra.mxu0 0.0
    %258 = vmatprep.subr.mxu0 0.0
    %259 = vmatpush2.msra.mxu0 0.0
    %260 = vmatprep.subr.mxu0 0.0
    %261 = vmatpush2.msra.mxu0 0.0
    %262 = vmatprep.subr.mxu0 0.0
    %263 = vmatpush2.msra.mxu0 0.0
    %264 = vmatprep.subr.mxu0 0.0
    %265 = vmatpush2.msra.mxu0 0.0
    %266 = vmatprep.subr.mxu0 0.0
    %267 = vmatpush2.msra.mxu0 0.0
    %268 = vmatprep.subr.mxu0 0.0
    %269 = vmatpush2.msra.mxu0 0.0
    %270 = vmatprep.subr.mxu0 0.0
    %271 = vmatpush2.msra.mxu0 0.0
    %272 = vmatprep.subr.mxu0 0.0
    %273 = vmatpush2.msra.mxu0 0.0
    %274 = vmatprep.mubr.f32.mxu0 0.0
    %275 = vmatmul.mubr.f32.gmra.mxu0 %v208
    %v276 = vpop.f32.mrf.mxu0
    %v277 = vadd.f32 0.0, %v276
    %v278 = vpop.f32.mrf.mxu0
    %279 = vdwg.mxu0
    %v280 = vsel %vm59, %v207, %v126
    %282 = vst.msk [vmem:[#allocation6] sm:$0x3] %vm62, %v280
    %v285 = vrot.slane %v277, 7
    %v286 = vsel %vm59, %v285, %v197
    %vm288 = vcmask 254976
    %289 = vst.msk [vmem:[#allocation5] sm:$0x3] %vm288, %v286
    // Predicated region
    $region14: #{tpu_custom_call.1} parent=1 // pred_check
      _
    $region15: #{tpu_custom_call.1} parent=1 // pred_check_branch
      %291 = sbr.rel (0) target = $region17
    $region16: #{tpu_custom_call.1} parent=1 // pred_region
      %s293 = ssub.s32 32, 32
      %294 = vsyncadd [#allocation4], %s293
      %s296 = sshll.u32 [#allocation5], 4
      %s297 = int_to_ptr.vmem [resolvable:$true] %s296
      %299 = dma.vmem_to_hbm [thread:$0]  %s297, 32, %s2, [#allocation4]
    $region17: #{tpu_custom_call.1} parent=1 // pred_fallthru
      _
    // Predicated region
    $region18: #{tpu_custom_call.1} parent=1 // pred_check
      _
    $region19: #{tpu_custom_call.1} parent=1 // pred_check_branch
      %301 = sbr.rel (0) target = $region21
    $region20: #{tpu_custom_call.1} parent=1 // pred_region
      %s303 = ssub.s32 32, 32
      %304 = vsyncadd [#allocation7], %s303
      %s306 = sshll.u32 [#allocation6], 4
      %s307 = int_to_ptr.vmem [resolvable:$true] %s306
      %309 = dma.vmem_to_hbm [thread:$0]  %s307, 32, %s3, [#allocation7]
    $region21: #{tpu_custom_call.1} parent=1 // pred_fallthru
      _
    // Predicated region
    $region22: #{tpu_custom_call.1} parent=1 // pred_check
      _
    $region23: #{tpu_custom_call.1} parent=1 // pred_check_branch
      %311 = sbr.rel (0) target = $region25
    $region24: #{tpu_custom_call.1} parent=1 // pred_region
      %312 = dma.done [#allocation4], 32
    $region25: #{tpu_custom_call.1} parent=1 // pred_fallthru
      _
    // Predicated region
    $region26: #{tpu_custom_call.1} parent=1 // pred_check
      _
    $region27: #{tpu_custom_call.1} parent=1 // pred_check_branch
      %314 = sbr.rel (0) target = $region29
    $region28: #{tpu_custom_call.1} parent=1 // pred_region
      %315 = dma.done [#allocation7], 32
    $region29: #{tpu_custom_call.1} parent=1 // pred_fallthru
      _
    %316 = vsyncpa [#allocation3], 1
    %317 = vsyncpa [#allocation4], 1
    %318 = vsyncpa [#allocation7], 1

</llo_original>
